<compile_context>
chip_gen: v7x
topology: tpu7x:2x2x1
jax: 0.10.0
libtpu: 0.0.40
codegen_flags: <defaults>
</compile_context>

<pallas_src>
import jax
import jax.numpy as jnp
from jax.experimental import pallas as pl
from jax.experimental.pallas import tpu as pltpu


def _round_up(n, m):
    return ((n + m - 1) // m) * m


def odegru_kernel(dt_ref,                       # SMEM (T-1,) f32 step sizes
                  x_ref, h0_ref,                # VMEM (BT, OP), (BT, HP)
                  wode_t_ref, bode_ref,         # VMEM (HP, HP), (1, HP)
                  wx_t_ref, wh_t_ref, bi_ref,   # VMEM (OP, HP), (HP, HP), (1, HP)
                  who_t_ref, bo_ref,            # VMEM (HP, OUTP), (1, OUTP)
                  out_ref, hout_ref):           # VMEM (BT, OUTP), (BT, HP)
    n_steps = dt_ref.shape[0]                   # static

    # Hoist ODE weights/bias out of the Euler loop (stay vreg/VMEM resident).
    w_ode = wode_t_ref[...]
    b_ode = bode_ref[...]

    # --- h = odeint(func, h, t)[-1]: explicit Euler over the grid t ---
    def euler_step(i, h):
        dt = dt_ref[i]
        dh = jnp.tanh(
            jnp.dot(h, w_ode, preferred_element_type=jnp.float32) + b_ode)
        return h + dt * dh

    h = jax.lax.fori_loop(0, n_steps, euler_step, h0_ref[...], unroll=True)

    # --- GRU-style gating, exactly as written in the PyTorch forward ---
    # i2h(cat(x, h)) == x @ Wx^T + h @ Wh^T + b  (split weight, same math).
    pre = (jnp.dot(x_ref[...], wx_t_ref[...], preferred_element_type=jnp.float32)
           + jnp.dot(h, wh_t_ref[...], preferred_element_type=jnp.float32)
           + bi_ref[...])
    z = jax.nn.sigmoid(pre)       # in the source r == z; combined2 is dead code
    h_hat = jnp.tanh(pre)         # NOTE: source uses `combined`, not combined2
    h_new = z * h + (1.0 - z) * h_hat

    out_ref[...] = (jnp.dot(h_new, who_t_ref[...],
                            preferred_element_type=jnp.float32) + bo_ref[...])
    hout_ref[...] = h_new


def odegru_forward_batched(x, h, t, params):
    """x: (B, obs_dim), h: (B, nhidden), t: (T,)
       -> (out: (B, out_dim), h_new: (B, nhidden)).  Row-wise identical to the
       single-sample PyTorch forward."""
    B, obs_dim = x.shape
    nhidden = h.shape[1]
    out_dim = params["w_h2o"].shape[0]

    # Lane-dense padded feature sizes and batch tile.
    OP = _round_up(obs_dim, 128)
    HP = _round_up(nhidden, 128)
    OUTP = _round_up(out_dim, 128)
    BT = 128 if B >= 128 else _round_up(B, 8)
    BP = _round_up(B, BT)

    f32 = jnp.float32
    dt = (t[1:] - t[:-1]).astype(f32)                     # (T-1,) step sizes

    def pad2(a, rows, cols):
        a = a.astype(f32)
        return jnp.pad(a, ((0, rows - a.shape[0]), (0, cols - a.shape[1])))

    # Glue: 2-D row layouts, pre-transposed weights, zero-padded to lane-dense.
    x_p = pad2(x, BP, OP)
    h_p = pad2(h, BP, HP)
    wode_t = pad2(params["w_ode"].T, HP, HP)              # (HP, HP)
    bode = pad2(params["b_ode"].reshape(1, -1), 1, HP)
    w_i2h = params["w_i2h"]                               # (H, obs+H)
    wx_t = pad2(w_i2h[:, :obs_dim].T, OP, HP)             # (OP, HP)
    wh_t = pad2(w_i2h[:, obs_dim:].T, HP, HP)             # (HP, HP)
    bi = pad2(params["b_i2h"].reshape(1, -1), 1, HP)
    who_t = pad2(params["w_h2o"].T, HP, OUTP)             # (HP, OUTP)
    bo = pad2(params["b_h2o"].reshape(1, -1), 1, OUTP)

    grid = (BP // BT,)
    out_p, hnew_p = pl.pallas_call(
        odegru_kernel,
        grid=grid,
        in_specs=[
            pl.BlockSpec(memory_space=pltpu.MemorySpace.SMEM),   # dt (whole)
            pl.BlockSpec((BT, OP), lambda i: (i, 0)),            # x
            pl.BlockSpec((BT, HP), lambda i: (i, 0)),            # h0
            pl.BlockSpec((HP, HP), lambda i: (0, 0)),            # W_ode^T
            pl.BlockSpec((1, HP), lambda i: (0, 0)),             # b_ode
            pl.BlockSpec((OP, HP), lambda i: (0, 0)),            # Wx^T
            pl.BlockSpec((HP, HP), lambda i: (0, 0)),            # Wh^T
            pl.BlockSpec((1, HP), lambda i: (0, 0)),             # b_i2h
            pl.BlockSpec((HP, OUTP), lambda i: (0, 0)),          # W_h2o^T
            pl.BlockSpec((1, OUTP), lambda i: (0, 0)),           # b_h2o
        ],
        out_specs=(
            pl.BlockSpec((BT, OUTP), lambda i: (i, 0)),
            pl.BlockSpec((BT, HP), lambda i: (i, 0)),
        ),
        out_shape=(jax.ShapeDtypeStruct((BP, OUTP), f32),
                   jax.ShapeDtypeStruct((BP, HP), f32)),
        compiler_params=pltpu.CompilerParams(
            dimension_semantics=("parallel",)),
    )(dt, x_p, h_p, wode_t, bode, wx_t, wh_t, bi, who_t, bo)

    return out_p[:B, :out_dim], hnew_p[:B, :nhidden]


def odegru_forward(x, h, t, params):
    """Single-sample API matching the PyTorch module: x (obs,), h (H,)."""
    out, hnew = odegru_forward_batched(x[None, :], h[None, :], t, params)
    return out[0], hnew[0]


def _reference_forward(x, h, t, params):
    """Pure-JAX single-sample reference with identical semantics."""
    for i in range(t.shape[0] - 1):
        dt = t[i + 1] - t[i]
        h = h + dt * jnp.tanh(params["w_ode"] @ h + params["b_ode"])
    combined = jnp.concatenate([x, h])
    pre = params["w_i2h"] @ combined + params["b_i2h"]
    z = jax.nn.sigmoid(pre)
    h_hat = jnp.tanh(pre)
    h_new = z * h + (1.0 - z) * h_hat
    out = params["w_h2o"] @ h_new + params["b_h2o"]
    return out, h_new


if __name__ == "__main__":
    obs_dim, nhidden, out_dim, T, batch = 4, 32, 3, 8, 8

    key = jax.random.PRNGKey(0)
    keys = jax.random.split(key, 8)
    scale = 0.1
    params = {
        "w_ode": scale * jax.random.normal(keys[0], (nhidden, nhidden), jnp.float32),
        "b_ode": scale * jax.random.normal(keys[1], (nhidden,), jnp.float32),
        "w_i2h": scale * jax.random.normal(keys[2], (nhidden, obs_dim + nhidden), jnp.float32),
        "b_i2h": scale * jax.random.normal(keys[3], (nhidden,), jnp.float32),
        "w_h2o": scale * jax.random.normal(keys[4], (out_dim, nhidden), jnp.float32),
        "b_h2o": scale * jax.random.normal(keys[5], (out_dim,), jnp.float32),
    }
    x = jax.random.normal(keys[6], (batch, obs_dim), jnp.float32)
    h0 = jax.random.normal(keys[7], (batch, nhidden), jnp.float32)
    t = jnp.linspace(0.0, 1.0, T, dtype=jnp.float32)

    # Batched kernel call.
    out, h_new = odegru_forward_batched(x, h0, t, params)
    out = jax.block_until_ready(out)
    h_new = jax.block_until_ready(h_new)

    ref_out, ref_h = jax.vmap(
        lambda xi, hi: _reference_forward(xi, hi, t, params))(x, h0)
    assert out.shape == (batch, out_dim) and h_new.shape == (batch, nhidden)
    assert jnp.allclose(out, ref_out, atol=1e-4, rtol=1e-4)
    assert jnp.allclose(h_new, ref_h, atol=1e-4, rtol=1e-4)

    # Single-sample API (matches the PyTorch module's forward signature).
    out1, h1 = odegru_forward(x[0], h0[0], t, params)
    out1 = jax.block_until_ready(out1)
    assert jnp.allclose(out1, ref_out[0], atol=1e-4, rtol=1e-4)
    assert jnp.allclose(h1, ref_h[0], atol=1e-4, rtol=1e-4)

    print("KERNEL_OK")
</pallas_src>

<mosaic_0001>
module attributes {stable_mosaic.version = 11 : i64} {
  func.func @odegru_kernel(%arg0: i32, %arg1: memref<7xf32, #tpu.memory_space<smem>>, %arg2: memref<8x128xf32, #tpu.memory_space<vmem>>, %arg3: memref<8x128xf32, #tpu.memory_space<vmem>>, %arg4: memref<128x128xf32, #tpu.memory_space<vmem>>, %arg5: memref<1x128xf32, #tpu.memory_space<vmem>>, %arg6: memref<128x128xf32, #tpu.memory_space<vmem>>, %arg7: memref<128x128xf32, #tpu.memory_space<vmem>>, %arg8: memref<1x128xf32, #tpu.memory_space<vmem>>, %arg9: memref<128x128xf32, #tpu.memory_space<vmem>>, %arg10: memref<1x128xf32, #tpu.memory_space<vmem>>, %arg11: memref<8x128xf32, #tpu.memory_space<vmem>>, %arg12: memref<8x128xf32, #tpu.memory_space<vmem>>) attributes {dimension_semantics = [#tpu.dimension_semantics<parallel>], iteration_bounds = array<i64: 1>, scalar_prefetch = 0 : i64, scratch_operands = 0 : i64, tpu.core_type = #tpu.core_type<tc>, window_params = [{transform_indices = @transform_0, window_bounds = array<i64: 7>}, {transform_indices = @transform_1, window_bounds = array<i64: 8, 128>}, {transform_indices = @transform_2, window_bounds = array<i64: 8, 128>}, {pipeline_mode = #tpu.pipeline_mode<synchronous>, transform_indices = @transform_3, window_bounds = array<i64: 128, 128>}, {pipeline_mode = #tpu.pipeline_mode<synchronous>, transform_indices = @transform_4, window_bounds = array<i64: 1, 128>}, {pipeline_mode = #tpu.pipeline_mode<synchronous>, transform_indices = @transform_5, window_bounds = array<i64: 128, 128>}, {pipeline_mode = #tpu.pipeline_mode<synchronous>, transform_indices = @transform_6, window_bounds = array<i64: 128, 128>}, {pipeline_mode = #tpu.pipeline_mode<synchronous>, transform_indices = @transform_7, window_bounds = array<i64: 1, 128>}, {pipeline_mode = #tpu.pipeline_mode<synchronous>, transform_indices = @transform_8, window_bounds = array<i64: 128, 128>}, {pipeline_mode = #tpu.pipeline_mode<synchronous>, transform_indices = @transform_9, window_bounds = array<i64: 1, 128>}, {transform_indices = @transform_10, window_bounds = array<i64: 8, 128>}, {transform_indices = @transform_11, window_bounds = array<i64: 8, 128>}]} {
    %c0 = arith.constant 0 : index
    %c0_0 = arith.constant 0 : index
    %0 = vector.load %arg4[%c0, %c0_0] : memref<128x128xf32, #tpu.memory_space<vmem>>, vector<128x128xf32>
    %c0_1 = arith.constant 0 : index
    %c0_2 = arith.constant 0 : index
    %1 = vector.load %arg5[%c0_1, %c0_2] : memref<1x128xf32, #tpu.memory_space<vmem>>, vector<1x128xf32>
    %c0_3 = arith.constant 0 : index
    %c0_4 = arith.constant 0 : index
    %2 = vector.load %arg3[%c0_3, %c0_4] : memref<8x128xf32, #tpu.memory_space<vmem>>, vector<8x128xf32>
    %c0_i32 = arith.constant 0 : i32
    %3 = arith.index_cast %c0_i32 : i32 to index
    %4 = memref.load %arg1[%3] : memref<7xf32, #tpu.memory_space<smem>>
    %cst = arith.constant dense<0.000000e+00> : vector<8x128xf32>
    %5 = tpu.matmul %2, %0, %cst {dimension_numbers = #tpu.dot_dimension_numbers<[1], [0], [0], [1], [0, 0, 1, 1], [], []>} : vector<8x128xf32>, vector<128x128xf32>, vector<8x128xf32> -> vector<8x128xf32>
    %6 = vector.broadcast %1 : vector<1x128xf32> to vector<8x128xf32>
    %7 = arith.addf %5, %6 : vector<8x128xf32>
    %8 = math.tanh %7 : vector<8x128xf32>
    %9 = vector.broadcast %4 : f32 to vector<8x128xf32>
    %10 = arith.mulf %9, %8 : vector<8x128xf32>
    %11 = arith.addf %2, %10 : vector<8x128xf32>
    %c1_i32 = arith.constant 1 : i32
    %12 = arith.index_cast %c1_i32 : i32 to index
    %13 = memref.load %arg1[%12] : memref<7xf32, #tpu.memory_space<smem>>
    %cst_5 = arith.constant dense<0.000000e+00> : vector<8x128xf32>
    %14 = tpu.matmul %11, %0, %cst_5 {dimension_numbers = #tpu.dot_dimension_numbers<[1], [0], [0], [1], [0, 0, 1, 1], [], []>} : vector<8x128xf32>, vector<128x128xf32>, vector<8x128xf32> -> vector<8x128xf32>
    %15 = vector.broadcast %1 : vector<1x128xf32> to vector<8x128xf32>
    %16 = arith.addf %14, %15 : vector<8x128xf32>
    %17 = math.tanh %16 : vector<8x128xf32>
    %18 = vector.broadcast %13 : f32 to vector<8x128xf32>
    %19 = arith.mulf %18, %17 : vector<8x128xf32>
    %20 = arith.addf %11, %19 : vector<8x128xf32>
    %c2_i32 = arith.constant 2 : i32
    %21 = arith.index_cast %c2_i32 : i32 to index
    %22 = memref.load %arg1[%21] : memref<7xf32, #tpu.memory_space<smem>>
    %cst_6 = arith.constant dense<0.000000e+00> : vector<8x128xf32>
    %23 = tpu.matmul %20, %0, %cst_6 {dimension_numbers = #tpu.dot_dimension_numbers<[1], [0], [0], [1], [0, 0, 1, 1], [], []>} : vector<8x128xf32>, vector<128x128xf32>, vector<8x128xf32> -> vector<8x128xf32>
    %24 = vector.broadcast %1 : vector<1x128xf32> to vector<8x128xf32>
    %25 = arith.addf %23, %24 : vector<8x128xf32>
    %26 = math.tanh %25 : vector<8x128xf32>
    %27 = vector.broadcast %22 : f32 to vector<8x128xf32>
    %28 = arith.mulf %27, %26 : vector<8x128xf32>
    %29 = arith.addf %20, %28 : vector<8x128xf32>
    %c3_i32 = arith.constant 3 : i32
    %30 = arith.index_cast %c3_i32 : i32 to index
    %31 = memref.load %arg1[%30] : memref<7xf32, #tpu.memory_space<smem>>
    %cst_7 = arith.constant dense<0.000000e+00> : vector<8x128xf32>
    %32 = tpu.matmul %29, %0, %cst_7 {dimension_numbers = #tpu.dot_dimension_numbers<[1], [0], [0], [1], [0, 0, 1, 1], [], []>} : vector<8x128xf32>, vector<128x128xf32>, vector<8x128xf32> -> vector<8x128xf32>
    %33 = vector.broadcast %1 : vector<1x128xf32> to vector<8x128xf32>
    %34 = arith.addf %32, %33 : vector<8x128xf32>
    %35 = math.tanh %34 : vector<8x128xf32>
    %36 = vector.broadcast %31 : f32 to vector<8x128xf32>
    %37 = arith.mulf %36, %35 : vector<8x128xf32>
    %38 = arith.addf %29, %37 : vector<8x128xf32>
    %c4_i32 = arith.constant 4 : i32
    %39 = arith.index_cast %c4_i32 : i32 to index
    %40 = memref.load %arg1[%39] : memref<7xf32, #tpu.memory_space<smem>>
    %cst_8 = arith.constant dense<0.000000e+00> : vector<8x128xf32>
    %41 = tpu.matmul %38, %0, %cst_8 {dimension_numbers = #tpu.dot_dimension_numbers<[1], [0], [0], [1], [0, 0, 1, 1], [], []>} : vector<8x128xf32>, vector<128x128xf32>, vector<8x128xf32> -> vector<8x128xf32>
    %42 = vector.broadcast %1 : vector<1x128xf32> to vector<8x128xf32>
    %43 = arith.addf %41, %42 : vector<8x128xf32>
    %44 = math.tanh %43 : vector<8x128xf32>
    %45 = vector.broadcast %40 : f32 to vector<8x128xf32>
    %46 = arith.mulf %45, %44 : vector<8x128xf32>
    %47 = arith.addf %38, %46 : vector<8x128xf32>
    %c5_i32 = arith.constant 5 : i32
    %48 = arith.index_cast %c5_i32 : i32 to index
    %49 = memref.load %arg1[%48] : memref<7xf32, #tpu.memory_space<smem>>
    %cst_9 = arith.constant dense<0.000000e+00> : vector<8x128xf32>
    %50 = tpu.matmul %47, %0, %cst_9 {dimension_numbers = #tpu.dot_dimension_numbers<[1], [0], [0], [1], [0, 0, 1, 1], [], []>} : vector<8x128xf32>, vector<128x128xf32>, vector<8x128xf32> -> vector<8x128xf32>
    %51 = vector.broadcast %1 : vector<1x128xf32> to vector<8x128xf32>
    %52 = arith.addf %50, %51 : vector<8x128xf32>
    %53 = math.tanh %52 : vector<8x128xf32>
    %54 = vector.broadcast %49 : f32 to vector<8x128xf32>
    %55 = arith.mulf %54, %53 : vector<8x128xf32>
    %56 = arith.addf %47, %55 : vector<8x128xf32>
    %c6_i32 = arith.constant 6 : i32
    %57 = arith.index_cast %c6_i32 : i32 to index
    %58 = memref.load %arg1[%57] : memref<7xf32, #tpu.memory_space<smem>>
    %cst_10 = arith.constant dense<0.000000e+00> : vector<8x128xf32>
    %59 = tpu.matmul %56, %0, %cst_10 {dimension_numbers = #tpu.dot_dimension_numbers<[1], [0], [0], [1], [0, 0, 1, 1], [], []>} : vector<8x128xf32>, vector<128x128xf32>, vector<8x128xf32> -> vector<8x128xf32>
    %60 = vector.broadcast %1 : vector<1x128xf32> to vector<8x128xf32>
    %61 = arith.addf %59, %60 : vector<8x128xf32>
    %62 = math.tanh %61 : vector<8x128xf32>
    %63 = vector.broadcast %58 : f32 to vector<8x128xf32>
    %64 = arith.mulf %63, %62 : vector<8x128xf32>
    %65 = arith.addf %56, %64 : vector<8x128xf32>
    %c7_i32 = arith.constant 7 : i32
    %c0_11 = arith.constant 0 : index
    %c0_12 = arith.constant 0 : index
    %66 = vector.load %arg2[%c0_11, %c0_12] : memref<8x128xf32, #tpu.memory_space<vmem>>, vector<8x128xf32>
    %c0_13 = arith.constant 0 : index
    %c0_14 = arith.constant 0 : index
    %67 = vector.load %arg6[%c0_13, %c0_14] : memref<128x128xf32, #tpu.memory_space<vmem>>, vector<128x128xf32>
    %cst_15 = arith.constant dense<0.000000e+00> : vector<8x128xf32>
    %68 = tpu.matmul %66, %67, %cst_15 {dimension_numbers = #tpu.dot_dimension_numbers<[1], [0], [0], [1], [0, 0, 1, 1], [], []>} : vector<8x128xf32>, vector<128x128xf32>, vector<8x128xf32> -> vector<8x128xf32>
    %c0_16 = arith.constant 0 : index
    %c0_17 = arith.constant 0 : index
    %69 = vector.load %arg7[%c0_16, %c0_17] : memref<128x128xf32, #tpu.memory_space<vmem>>, vector<128x128xf32>
    %cst_18 = arith.constant dense<0.000000e+00> : vector<8x128xf32>
    %70 = tpu.matmul %65, %69, %cst_18 {dimension_numbers = #tpu.dot_dimension_numbers<[1], [0], [0], [1], [0, 0, 1, 1], [], []>} : vector<8x128xf32>, vector<128x128xf32>, vector<8x128xf32> -> vector<8x128xf32>
    %71 = arith.addf %68, %70 : vector<8x128xf32>
    %c0_19 = arith.constant 0 : index
    %c0_20 = arith.constant 0 : index
    %72 = vector.load %arg8[%c0_19, %c0_20] : memref<1x128xf32, #tpu.memory_space<vmem>>, vector<1x128xf32>
    %73 = vector.broadcast %72 : vector<1x128xf32> to vector<8x128xf32>
    %74 = arith.addf %71, %73 : vector<8x128xf32>
    %75 = arith.negf %74 : vector<8x128xf32>
    %76 = math.exp %75 : vector<8x128xf32>
    %cst_21 = arith.constant 1.000000e+00 : f32
    %77 = vector.broadcast %cst_21 : f32 to vector<8x128xf32>
    %78 = arith.addf %77, %76 : vector<8x128xf32>
    %79 = arith.divf %77, %78 : vector<8x128xf32>
    %80 = math.tanh %74 : vector<8x128xf32>
    %81 = arith.mulf %79, %65 : vector<8x128xf32>
    %cst_22 = arith.constant 1.000000e+00 : f32
    %82 = vector.broadcast %cst_22 : f32 to vector<8x128xf32>
    %83 = arith.subf %82, %79 : vector<8x128xf32>
    %84 = arith.mulf %83, %80 : vector<8x128xf32>
    %85 = arith.addf %81, %84 : vector<8x128xf32>
    %c0_23 = arith.constant 0 : index
    %c0_24 = arith.constant 0 : index
    %86 = vector.load %arg9[%c0_23, %c0_24] : memref<128x128xf32, #tpu.memory_space<vmem>>, vector<128x128xf32>
    %cst_25 = arith.constant dense<0.000000e+00> : vector<8x128xf32>
    %87 = tpu.matmul %85, %86, %cst_25 {dimension_numbers = #tpu.dot_dimension_numbers<[1], [0], [0], [1], [0, 0, 1, 1], [], []>} : vector<8x128xf32>, vector<128x128xf32>, vector<8x128xf32> -> vector<8x128xf32>
    %c0_26 = arith.constant 0 : index
    %c0_27 = arith.constant 0 : index
    %88 = vector.load %arg10[%c0_26, %c0_27] : memref<1x128xf32, #tpu.memory_space<vmem>>, vector<1x128xf32>
    %89 = vector.broadcast %88 : vector<1x128xf32> to vector<8x128xf32>
    %90 = arith.addf %87, %89 : vector<8x128xf32>
    %c0_28 = arith.constant 0 : index
    %c0_29 = arith.constant 0 : index
    %91 = vector.load %arg11[%c0_28, %c0_29] : memref<8x128xf32, #tpu.memory_space<vmem>>, vector<8x128xf32>
    tpu.vector_store %arg11[%c0_28, %c0_29], %90 {strides = array<i32>} : memref<8x128xf32, #tpu.memory_space<vmem>>, vector<8x128xf32>,
    %c0_30 = arith.constant 0 : index
    %c0_31 = arith.constant 0 : index
    %92 = vector.load %arg12[%c0_30, %c0_31] : memref<8x128xf32, #tpu.memory_space<vmem>>, vector<8x128xf32>
    tpu.vector_store %arg12[%c0_30, %c0_31], %85 {strides = array<i32>} : memref<8x128xf32, #tpu.memory_space<vmem>>, vector<8x128xf32>,
    return
  }
  func.func @transform_0(%arg0: i32) -> i32 {
    %c0_i32 = arith.constant 0 : i32
    %c0_i32_0 = arith.constant 0 : i32
    return %c0_i32 : i32
  }
  func.func @transform_1(%arg0: i32) -> (i32, i32) {
    %c0_i32 = arith.constant 0 : i32
    %c0_i32_0 = arith.constant 0 : i32
    return %arg0, %c0_i32 : i32, i32
  }
  func.func @transform_2(%arg0: i32) -> (i32, i32) {
    %c0_i32 = arith.constant 0 : i32
    %c0_i32_0 = arith.constant 0 : i32
    return %arg0, %c0_i32 : i32, i32
  }
  func.func @transform_3(%arg0: i32) -> (i32, i32) {
    %c0_i32 = arith.constant 0 : i32
    %c0_i32_0 = arith.constant 0 : i32
    %c0_i32_1 = arith.constant 0 : i32
    return %c0_i32, %c0_i32_0 : i32, i32
  }
  func.func @transform_4(%arg0: i32) -> (i32, i32) {
    %c0_i32 = arith.constant 0 : i32
    %c0_i32_0 = arith.constant 0 : i32
    %c0_i32_1 = arith.constant 0 : i32
    return %c0_i32, %c0_i32_0 : i32, i32
  }
  func.func @transform_5(%arg0: i32) -> (i32, i32) {
    %c0_i32 = arith.constant 0 : i32
    %c0_i32_0 = arith.constant 0 : i32
    %c0_i32_1 = arith.constant 0 : i32
    return %c0_i32, %c0_i32_0 : i32, i32
  }
  func.func @transform_6(%arg0: i32) -> (i32, i32) {
    %c0_i32 = arith.constant 0 : i32
    %c0_i32_0 = arith.constant 0 : i32
    %c0_i32_1 = arith.constant 0 : i32
    return %c0_i32, %c0_i32_0 : i32, i32
  }
  func.func @transform_7(%arg0: i32) -> (i32, i32) {
    %c0_i32 = arith.constant 0 : i32
    %c0_i32_0 = arith.constant 0 : i32
    %c0_i32_1 = arith.constant 0 : i32
    return %c0_i32, %c0_i32_0 : i32, i32
  }
  func.func @transform_8(%arg0: i32) -> (i32, i32) {
    %c0_i32 = arith.constant 0 : i32
    %c0_i32_0 = arith.constant 0 : i32
    %c0_i32_1 = arith.constant 0 : i32
    return %c0_i32, %c0_i32_0 : i32, i32
  }
  func.func @transform_9(%arg0: i32) -> (i32, i32) {
    %c0_i32 = arith.constant 0 : i32
    %c0_i32_0 = arith.constant 0 : i32
    %c0_i32_1 = arith.constant 0 : i32
    return %c0_i32, %c0_i32_0 : i32, i32
  }
  func.func @transform_10(%arg0: i32) -> (i32, i32) {
    %c0_i32 = arith.constant 0 : i32
    %c0_i32_0 = arith.constant 0 : i32
    return %arg0, %c0_i32 : i32, i32
  }
  func.func @transform_11(%arg0: i32) -> (i32, i32) {
    %c0_i32 = arith.constant 0 : i32
    %c0_i32_0 = arith.constant 0 : i32
    return %arg0, %c0_i32 : i32, i32
  }
}

</mosaic_0001>

<llo_original>
// kernel: tpu_custom_call.1
$region0: #{tpu_custom_call.1}
  #allocation0 [shape = 'u32[]', space=smem, size = 0x4, offset = 0x4, fixed_abs, tag = 'smem constant byte address 0x4 - core index']
  #allocation1 [shape = 'u32[144,128]{1,0:T(1,128)}', space=vmem, size = 0x12000, scoped, tag = 'internal scratch']
  %s0 = inlined_call_operand.hbm [shape: f32[7], index: 0, kind: input, shape index: {}]
  %s1 = inlined_call_operand.hbm [shape: f32[8,128], index: 1, kind: input, shape index: {}]
  %s2 = inlined_call_operand.hbm [shape: f32[8,128], index: 2, kind: input, shape index: {}]
  %s3 = inlined_call_operand.hbm [shape: f32[128,128], index: 3, kind: input, shape index: {}]
  %s4 = inlined_call_operand.vmem [shape: f32[1,128], index: 4, kind: input, shape index: {}]
  %s5 = inlined_call_operand.hbm [shape: f32[128,128], index: 5, kind: input, shape index: {}]
  %s6 = inlined_call_operand.hbm [shape: f32[128,128], index: 6, kind: input, shape index: {}]
  %s7 = inlined_call_operand.vmem [shape: f32[1,128], index: 7, kind: input, shape index: {}]
  %s8 = inlined_call_operand.hbm [shape: f32[128,128], index: 8, kind: input, shape index: {}]
  %s9 = inlined_call_operand.vmem [shape: f32[1,128], index: 9, kind: input, shape index: {}]
  %s10 = inlined_call_operand.hbm [shape: f32[8,128], index: 10, kind: output, shape index: {0}]
  %s11 = inlined_call_operand.hbm [shape: f32[8,128], index: 11, kind: output, shape index: {1}]
  %12 = xla_tuple %s10, %s11
  %s13 = sld [smem:[#allocation0]]
  $region86: #{tpu_custom_call.1} parent=0
    _
  %s15 = ssub.s32 1, %s13
  %s16 = scalar_select 0, %s15, %s13
  $region1: #{tpu_custom_call.1} parent=0
    #allocation2 [shape = 'u8[512]{0}', space=smem, size = 0x200, scoped, tag = 'input window, operand 0, single buffered']
    #allocation3 [shape = 's32[1]{0}', space=sflag, size = 0x4, scoped, tag = 'scoped memory for tpu_custom_call.1']
    #allocation4 [shape = 's32[1]{0}', space=sflag, size = 0x4, scoped, tag = 'scoped memory for tpu_custom_call.1']
    #allocation5 [shape = 's32[1]{0}', space=sflag, size = 0x4, scoped, tag = 'scoped memory for tpu_custom_call.1']
    #allocation6 [shape = 'u8[4096]{0}', space=vmem, size = 0x1000, scoped, tag = 'input window, operand 1, single buffered']
    #allocation7 [shape = 'u8[4096]{0}', space=vmem, size = 0x1000, scoped, tag = 'input window, operand 2, single buffered']
    #allocation8 [shape = 's32[1]{0}', space=sflag, size = 0x4, scoped, tag = 'scoped memory for tpu_custom_call.1']
    #allocation9 [shape = 'u8[65536]{0}', space=vmem, size = 0x10000, scoped, tag = 'input window, operand 3, single buffered']
    #allocation10 [shape = 'u8[65536]{0}', space=vmem, size = 0x10000, scoped, tag = 'input window, operand 5, single buffered']
    #allocation11 [shape = 's32[1]{0}', space=sflag, size = 0x4, scoped, tag = 'scoped memory for tpu_custom_call.1']
    #allocation12 [shape = 'u8[65536]{0}', space=vmem, size = 0x10000, scoped, tag = 'input window, operand 6, single buffered']
    #allocation13 [shape = 'u8[65536]{0}', space=vmem, size = 0x10000, scoped, tag = 'input window, operand 8, single buffered']
    #allocation14 [shape = 's32[1]{0}', space=sflag, size = 0x4, scoped, tag = 'scoped memory for tpu_custom_call.1']
    #allocation15 [shape = 'u8[4096]{0}', space=vmem, size = 0x1000, scoped, tag = 'output window, operand 0, single buffered']
    #allocation16 [shape = 'u8[4096]{0}', space=vmem, size = 0x1000, scoped, tag = 'output window, operand 1, single buffered']
    #allocation17 [shape = 's32[1]{0}', space=sflag, size = 0x4, scoped, tag = 'scoped memory for tpu_custom_call.1']
    %17 = vsyncpa [#allocation5], 0
    %18 = vsyncpa [#allocation3], 0
    %19 = vsyncpa [#allocation8], 0
    %20 = vsyncpa [#allocation11], 0
    %21 = vsyncpa [#allocation14], 0
    %22 = vsyncpa [#allocation4], 0
    %23 = vsyncpa [#allocation17], 0
    // Predicated region
    $region2: #{tpu_custom_call.1} parent=1 // pred_check
      _
    $region3: #{tpu_custom_call.1} parent=1 // pred_check_branch
      %25 = sbr.rel (0) target = $region5
    $region4: #{tpu_custom_call.1} parent=1 // pred_region
      %s27 = ssub.s32 16, 16
      %28 = vsyncadd [#allocation5], %s27
      %31 = dma.hbm_to_smem %s0, 16, [#allocation2], [#allocation5]
    $region5: #{tpu_custom_call.1} parent=1 // pred_fallthru
      _
    // Predicated region
    $region6: #{tpu_custom_call.1} parent=1 // pred_check
      _
    $region7: #{tpu_custom_call.1} parent=1 // pred_check_branch
      %33 = sbr.rel (0) target = $region9
    $region8: #{tpu_custom_call.1} parent=1 // pred_region
      %s35 = ssub.s32 128, 128
      %36 = vsyncadd [#allocation3], %s35
      %s38 = sshll.u32 [#allocation6], 4
      %s39 = int_to_ptr.vmem [resolvable:$true] %s38
      %41 = dma.hbm_to_vmem [thread:$0]  %s1, 128, %s39, [#allocation3]
    $region9: #{tpu_custom_call.1} parent=1 // pred_fallthru
      _
    // Predicated region
    $region10: #{tpu_custom_call.1} parent=1 // pred_check
      _
    $region11: #{tpu_custom_call.1} parent=1 // pred_check_branch
      %43 = sbr.rel (0) target = $region13
    $region12: #{tpu_custom_call.1} parent=1 // pred_region
      %s45 = ssub.s32 128, 128
      %46 = vsyncadd [#allocation8], %s45
      %s48 = sshll.u32 [#allocation7], 4
      %s49 = int_to_ptr.vmem [resolvable:$true] %s48
      %51 = dma.hbm_to_vmem [thread:$0]  %s2, 128, %s49, [#allocation8]
    $region13: #{tpu_custom_call.1} parent=1 // pred_fallthru
      _
    // Predicated region
    $region14: #{tpu_custom_call.1} parent=1 // pred_check
      _
    $region15: #{tpu_custom_call.1} parent=1 // pred_check_branch
      %53 = sbr.rel (0) target = $region17
    $region16: #{tpu_custom_call.1} parent=1 // pred_region
      %s55 = ssub.s32 2048, 2048
      %56 = vsyncadd [#allocation8], %s55
      %s57 = sshll.u32 [#allocation9], 4
      %s58 = int_to_ptr.vmem [resolvable:$true] %s57
      %63 = dma.hbm_to_vmem [thread:$0]  %s3, 2048, %s58, [#allocation8], 128, 128, 8
    $region17: #{tpu_custom_call.1} parent=1 // pred_fallthru
      _
    // Predicated region
    $region18: #{tpu_custom_call.1} parent=1 // pred_check
      _
    $region19: #{tpu_custom_call.1} parent=1 // pred_check_branch
      %65 = sbr.rel (0) target = $region21
    $region20: #{tpu_custom_call.1} parent=1 // pred_region
      _
    $region21: #{tpu_custom_call.1} parent=1 // pred_fallthru
      _
    // Predicated region
    $region22: #{tpu_custom_call.1} parent=1 // pred_check
      _
    $region23: #{tpu_custom_call.1} parent=1 // pred_check_branch
      %67 = sbr.rel (0) target = $region25
    $region24: #{tpu_custom_call.1} parent=1 // pred_region
      %s69 = ssub.s32 2048, 2048
      %70 = vsyncadd [#allocation11], %s69
      %s71 = sshll.u32 [#allocation10], 4
      %s72 = int_to_ptr.vmem [resolvable:$true] %s71
      %77 = dma.hbm_to_vmem [thread:$0]  %s5, 2048, %s72, [#allocation11], 128, 128, 8
    $region25: #{tpu_custom_call.1} parent=1 // pred_fallthru
      _
    // Predicated region
    $region26: #{tpu_custom_call.1} parent=1 // pred_check
      _
    $region27: #{tpu_custom_call.1} parent=1 // pred_check_branch
      %79 = sbr.rel (0) target = $region29
    $region28: #{tpu_custom_call.1} parent=1 // pred_region
      %s81 = ssub.s32 2048, 2048
      %82 = vsyncadd [#allocation11], %s81
      %s83 = sshll.u32 [#allocation12], 4
      %s84 = int_to_ptr.vmem [resolvable:$true] %s83
      %89 = dma.hbm_to_vmem [thread:$0]  %s6, 2048, %s84, [#allocation11], 128, 128, 8
    $region29: #{tpu_custom_call.1} parent=1 // pred_fallthru
      _
    // Predicated region
    $region30: #{tpu_custom_call.1} parent=1 // pred_check
      _
    $region31: #{tpu_custom_call.1} parent=1 // pred_check_branch
      %91 = sbr.rel (0) target = $region33
    $region32: #{tpu_custom_call.1} parent=1 // pred_region
      _
    $region33: #{tpu_custom_call.1} parent=1 // pred_fallthru
      _
    // Predicated region
    $region34: #{tpu_custom_call.1} parent=1 // pred_check
      _
    $region35: #{tpu_custom_call.1} parent=1 // pred_check_branch
      %93 = sbr.rel (0) target = $region37
    $region36: #{tpu_custom_call.1} parent=1 // pred_region
      %s95 = ssub.s32 2048, 2048
      %96 = vsyncadd [#allocation14], %s95
      %s97 = sshll.u32 [#allocation13], 4
      %s98 = int_to_ptr.vmem [resolvable:$true] %s97
      %103 = dma.hbm_to_vmem [thread:$0]  %s8, 2048, %s98, [#allocation14], 128, 128, 8
    $region37: #{tpu_custom_call.1} parent=1 // pred_fallthru
      _
    // Predicated region
    $region38: #{tpu_custom_call.1} parent=1 // pred_check
      _
    $region39: #{tpu_custom_call.1} parent=1 // pred_check_branch
      %105 = sbr.rel (0) target = $region41
    $region40: #{tpu_custom_call.1} parent=1 // pred_region
      _
    $region41: #{tpu_custom_call.1} parent=1 // pred_fallthru
      _
    // Predicated region
    $region42: #{tpu_custom_call.1} parent=1 // pred_check
      _
    $region43: #{tpu_custom_call.1} parent=1 // pred_check_branch
      %107 = sbr.rel (0) target = $region45
    $region44: #{tpu_custom_call.1} parent=1 // pred_region
      %108 = dma.done [#allocation5], 16
    $region45: #{tpu_custom_call.1} parent=1 // pred_fallthru
      _
    // Predicated region
    $region46: #{tpu_custom_call.1} parent=1 // pred_check
      _
    $region47: #{tpu_custom_call.1} parent=1 // pred_check_branch
      %110 = sbr.rel (0) target = $region49
    $region48: #{tpu_custom_call.1} parent=1 // pred_region
      %111 = dma.done [#allocation3], 128
    $region49: #{tpu_custom_call.1} parent=1 // pred_fallthru
      _
    // Predicated region
    $region50: #{tpu_custom_call.1} parent=1 // pred_check
      _
    $region51: #{tpu_custom_call.1} parent=1 // pred_check_branch
      %113 = sbr.rel (0) target = $region53
    $region52: #{tpu_custom_call.1} parent=1 // pred_region
      %114 = dma.done [#allocation8], 128
    $region53: #{tpu_custom_call.1} parent=1 // pred_fallthru
      _
    // Predicated region
    $region54: #{tpu_custom_call.1} parent=1 // pred_check
      _
    $region55: #{tpu_custom_call.1} parent=1 // pred_check_branch
      %116 = sbr.rel (0) target = $region57
    $region56: #{tpu_custom_call.1} parent=1 // pred_region
      %117 = dma.done [#allocation8], 2048
    $region57: #{tpu_custom_call.1} parent=1 // pred_fallthru
      _
    // Predicated region
    $region58: #{tpu_custom_call.1} parent=1 // pred_check
      _
    $region59: #{tpu_custom_call.1} parent=1 // pred_check_branch
      %119 = sbr.rel (0) target = $region61
    $region60: #{tpu_custom_call.1} parent=1 // pred_region
      %120 = dma.done [#allocation11], 2048
    $region61: #{tpu_custom_call.1} parent=1 // pred_fallthru
      _
    // Predicated region
    $region62: #{tpu_custom_call.1} parent=1 // pred_check
      _
    $region63: #{tpu_custom_call.1} parent=1 // pred_check_branch
      %122 = sbr.rel (0) target = $region65
    $region64: #{tpu_custom_call.1} parent=1 // pred_region
      %123 = dma.done [#allocation11], 2048
    $region65: #{tpu_custom_call.1} parent=1 // pred_fallthru
      _
    // Predicated region
    $region66: #{tpu_custom_call.1} parent=1 // pred_check
      _
    $region67: #{tpu_custom_call.1} parent=1 // pred_check_branch
      %125 = sbr.rel (0) target = $region69
    $region68: #{tpu_custom_call.1} parent=1 // pred_region
      %126 = dma.done [#allocation14], 2048
    $region69: #{tpu_custom_call.1} parent=1 // pred_fallthru
      _
    %127 = sfence
    %v128 = vld [vmem:[#allocation9] sm:$0xff]
    %v129 = vld [vmem:[#allocation9 + $0x8] sm:$0xff]
    %v130 = vld [vmem:[#allocation9 + $0x10] sm:$0xff]
    %v131 = vld [vmem:[#allocation9 + $0x18] sm:$0xff]
    %v132 = vld [vmem:[#allocation9 + $0x20] sm:$0xff]
    %v133 = vld [vmem:[#allocation9 + $0x28] sm:$0xff]
    %v134 = vld [vmem:[#allocation9 + $0x30] sm:$0xff]
    %v135 = vld [vmem:[#allocation9 + $0x38] sm:$0xff]
    %v136 = vld [vmem:[#allocation9 + $0x40] sm:$0xff]
    %v137 = vld [vmem:[#allocation9 + $0x48] sm:$0xff]
    %v138 = vld [vmem:[#allocation9 + $0x50] sm:$0xff]
    %v139 = vld [vmem:[#allocation9 + $0x58] sm:$0xff]
    %v140 = vld [vmem:[#allocation9 + $0x60] sm:$0xff]
    %v141 = vld [vmem:[#allocation9 + $0x68] sm:$0xff]
    %v142 = vld [vmem:[#allocation9 + $0x70] sm:$0xff]
    %v143 = vld [vmem:[#allocation9 + $0x78] sm:$0xff]
    %v144 = vld [vmem:[%s4] sm:$0x1]
    %v145 = vld [vmem:[#allocation7] sm:$0xff]
    %s146 = sld [smem:[#allocation2]]
    %v148 = vlaneseq
    %v149 = vshrl.u32 %v148, 7
    %v150 = vsub.s32 0, %v149
    %v151 = vrot.slane %v144, %v150
    %153 = vmatprep.subr.mxu0 0.0
    %154 = vmatpush1.msra.mxu0 %v128
    %155 = vmatprep.subr.mxu0 0.0
    %156 = vmatpush1.msra.mxu0 %v129
    %157 = vmatprep.subr.mxu0 0.0
    %158 = vmatpush1.msra.mxu0 %v130
    %159 = vmatprep.subr.mxu0 0.0
    %160 = vmatpush1.msra.mxu0 %v131
    %161 = vmatprep.subr.mxu0 0.0
    %162 = vmatpush1.msra.mxu0 %v132
    %163 = vmatprep.subr.mxu0 0.0
    %164 = vmatpush1.msra.mxu0 %v133
    %165 = vmatprep.subr.mxu0 0.0
    %166 = vmatpush1.msra.mxu0 %v134
    %167 = vmatprep.subr.mxu0 0.0
    %168 = vmatpush1.msra.mxu0 %v135
    %169 = vmatprep.subr.mxu0 0.0
    %170 = vmatpush1.msra.mxu0 %v136
    %171 = vmatprep.subr.mxu0 0.0
    %172 = vmatpush1.msra.mxu0 %v137
    %173 = vmatprep.subr.mxu0 0.0
    %174 = vmatpush1.msra.mxu0 %v138
    %175 = vmatprep.subr.mxu0 0.0
    %176 = vmatpush1.msra.mxu0 %v139
    %177 = vmatprep.subr.mxu0 0.0
    %178 = vmatpush1.msra.mxu0 %v140
    %179 = vmatprep.subr.mxu0 0.0
    %180 = vmatpush1.msra.mxu0 %v141
    %181 = vmatprep.subr.mxu0 0.0
    %182 = vmatpush1.msra.mxu0 %v142
    %183 = vmatprep.subr.mxu0 0.0
    %184 = vmatpush1.msra.mxu0 %v143
    %185 = vmatprep.subr.mxu0 0.0
    %186 = vmatpush1.msra.mxu0 0.0
    %187 = vmatprep.subr.mxu0 0.0
    %188 = vmatpush1.msra.mxu0 0.0
    %189 = vmatprep.subr.mxu0 0.0
    %190 = vmatpush1.msra.mxu0 0.0
    %191 = vmatprep.subr.mxu0 0.0
    %192 = vmatpush1.msra.mxu0 0.0
    %193 = vmatprep.subr.mxu0 0.0
    %194 = vmatpush1.msra.mxu0 0.0
    %195 = vmatprep.subr.mxu0 0.0
    %196 = vmatpush1.msra.mxu0 0.0
    %197 = vmatprep.subr.mxu0 0.0
    %198 = vmatpush1.msra.mxu0 0.0
    %199 = vmatprep.subr.mxu0 0.0
    %200 = vmatpush1.msra.mxu0 0.0
    %201 = vmatprep.subr.mxu0 0.0
    %202 = vmatpush1.msra.mxu0 0.0
    %203 = vmatprep.subr.mxu0 0.0
    %204 = vmatpush1.msra.mxu0 0.0
    %205 = vmatprep.subr.mxu0 0.0
    %206 = vmatpush1.msra.mxu0 0.0
    %207 = vmatprep.subr.mxu0 0.0
    %208 = vmatpush1.msra.mxu0 0.0
    %209 = vmatprep.subr.mxu0 0.0
    %210 = vmatpush1.msra.mxu0 0.0
    %211 = vmatprep.subr.mxu0 0.0
    %212 = vmatpush1.msra.mxu0 0.0
    %213 = vmatprep.subr.mxu0 0.0
    %214 = vmatpush1.msra.mxu0 0.0
    %215 = vmatprep.subr.mxu0 0.0
    %216 = vmatpush1.msra.mxu0 0.0
    %217 = vmatprep.mubr.f32.mxu0 0.0
    %218 = vmatmul.mubr.f32.gmra.mrb[0].mxu0 %v145
    %v219 = vpop.f32.mrb[0].mxu0
    %v220 = vadd.f32 %v151, %v219
    %v221 = vpop.f32.mrb[0].mxu0
    %222 = vdwg.mxu0
    %v223 = vtanh.pop %v220
    %v224 = vstv %s146
    %v225 = vmul.f32 %v224, %v223
    %v226 = vadd.f32 %v145, %v225
    %s227 = sld [smem:[#allocation2 + $0x1]]
    %228 = vmatprep.subr.mxu0 0.0
    %229 = vmatpush1.msra.mxu0 %v128
    %230 = vmatprep.subr.mxu0 0.0
    %231 = vmatpush1.msra.mxu0 %v129
    %232 = vmatprep.subr.mxu0 0.0
    %233 = vmatpush1.msra.mxu0 %v130
    %234 = vmatprep.subr.mxu0 0.0
    %235 = vmatpush1.msra.mxu0 %v131
    %236 = vmatprep.subr.mxu0 0.0
    %237 = vmatpush1.msra.mxu0 %v132
    %238 = vmatprep.subr.mxu0 0.0
    %239 = vmatpush1.msra.mxu0 %v133
    %240 = vmatprep.subr.mxu0 0.0
    %241 = vmatpush1.msra.mxu0 %v134
    %242 = vmatprep.subr.mxu0 0.0
    %243 = vmatpush1.msra.mxu0 %v135
    %244 = vmatprep.subr.mxu0 0.0
    %245 = vmatpush1.msra.mxu0 %v136
    %246 = vmatprep.subr.mxu0 0.0
    %247 = vmatpush1.msra.mxu0 %v137
    %248 = vmatprep.subr.mxu0 0.0
    %249 = vmatpush1.msra.mxu0 %v138
    %250 = vmatprep.subr.mxu0 0.0
    %251 = vmatpush1.msra.mxu0 %v139
    %252 = vmatprep.subr.mxu0 0.0
    %253 = vmatpush1.msra.mxu0 %v140
    %254 = vmatprep.subr.mxu0 0.0
    %255 = vmatpush1.msra.mxu0 %v141
    %256 = vmatprep.subr.mxu0 0.0
    %257 = vmatpush1.msra.mxu0 %v142
    %258 = vmatprep.subr.mxu0 0.0
    %259 = vmatpush1.msra.mxu0 %v143
    %260 = vmatprep.subr.mxu0 0.0
    %261 = vmatpush1.msra.mxu0 0.0
    %262 = vmatprep.subr.mxu0 0.0
    %263 = vmatpush1.msra.mxu0 0.0
    %264 = vmatprep.subr.mxu0 0.0
    %265 = vmatpush1.msra.mxu0 0.0
    %266 = vmatprep.subr.mxu0 0.0
    %267 = vmatpush1.msra.mxu0 0.0
    %268 = vmatprep.subr.mxu0 0.0
    %269 = vmatpush1.msra.mxu0 0.0
    %270 = vmatprep.subr.mxu0 0.0
    %271 = vmatpush1.msra.mxu0 0.0
    %272 = vmatprep.subr.mxu0 0.0
    %273 = vmatpush1.msra.mxu0 0.0
    %274 = vmatprep.subr.mxu0 0.0
    %275 = vmatpush1.msra.mxu0 0.0
    %276 = vmatprep.subr.mxu0 0.0
    %277 = vmatpush1.msra.mxu0 0.0
    %278 = vmatprep.subr.mxu0 0.0
    %279 = vmatpush1.msra.mxu0 0.0
    %280 = vmatprep.subr.mxu0 0.0
    %281 = vmatpush1.msra.mxu0 0.0
    %282 = vmatprep.subr.mxu0 0.0
    %283 = vmatpush1.msra.mxu0 0.0
    %284 = vmatprep.subr.mxu0 0.0
    %285 = vmatpush1.msra.mxu0 0.0
    %286 = vmatprep.subr.mxu0 0.0
    %287 = vmatpush1.msra.mxu0 0.0
    %288 = vmatprep.subr.mxu0 0.0
    %289 = vmatpush1.msra.mxu0 0.0
    %290 = vmatprep.subr.mxu0 0.0
    %291 = vmatpush1.msra.mxu0 0.0
    %292 = vmatprep.mubr.f32.mxu0 0.0
    %293 = vmatmul.mubr.f32.gmra.mrb[0].mxu0 %v226
    %v294 = vpop.f32.mrb[0].mxu0
    %v295 = vadd.f32 %v151, %v294
    %v296 = vpop.f32.mrb[0].mxu0
    %297 = vdwg.mxu0
    %v298 = vtanh.pop %v295
    %v299 = vstv %s227
    %v300 = vmul.f32 %v299, %v298
    %v301 = vadd.f32 %v226, %v300
    %s302 = sld [smem:[#allocation2 + $0x2]]
    %303 = vmatprep.subr.mxu0 0.0
    %304 = vmatpush1.msra.mxu0 %v128
    %305 = vmatprep.subr.mxu0 0.0
    %306 = vmatpush1.msra.mxu0 %v129
    %307 = vmatprep.subr.mxu0 0.0
    %308 = vmatpush1.msra.mxu0 %v130
    %309 = vmatprep.subr.mxu0 0.0
    %310 = vmatpush1.msra.mxu0 %v131
    %311 = vmatprep.subr.mxu0 0.0
    %312 = vmatpush1.msra.mxu0 %v132
    %313 = vmatprep.subr.mxu0 0.0
    %314 = vmatpush1.msra.mxu0 %v133
    %315 = vmatprep.subr.mxu0 0.0
    %316 = vmatpush1.msra.mxu0 %v134
    %317 = vmatprep.subr.mxu0 0.0
    %318 = vmatpush1.msra.mxu0 %v135
    %319 = vmatprep.subr.mxu0 0.0
    %320 = vmatpush1.msra.mxu0 %v136
    %321 = vmatprep.subr.mxu0 0.0
    %322 = vmatpush1.msra.mxu0 %v137
    %323 = vmatprep.subr.mxu0 0.0
    %324 = vmatpush1.msra.mxu0 %v138
    %325 = vmatprep.subr.mxu0 0.0
    %326 = vmatpush1.msra.mxu0 %v139
    %327 = vmatprep.subr.mxu0 0.0
    %328 = vmatpush1.msra.mxu0 %v140
    %329 = vmatprep.subr.mxu0 0.0
    %330 = vmatpush1.msra.mxu0 %v141
    %331 = vmatprep.subr.mxu0 0.0
    %332 = vmatpush1.msra.mxu0 %v142
    %333 = vmatprep.subr.mxu0 0.0
    %334 = vmatpush1.msra.mxu0 %v143
    %335 = vmatprep.subr.mxu0 0.0
    %336 = vmatpush1.msra.mxu0 0.0
    %337 = vmatprep.subr.mxu0 0.0
    %338 = vmatpush1.msra.mxu0 0.0
    %339 = vmatprep.subr.mxu0 0.0
    %340 = vmatpush1.msra.mxu0 0.0
    %341 = vmatprep.subr.mxu0 0.0
    %342 = vmatpush1.msra.mxu0 0.0
    %343 = vmatprep.subr.mxu0 0.0
    %344 = vmatpush1.msra.mxu0 0.0
    %345 = vmatprep.subr.mxu0 0.0
    %346 = vmatpush1.msra.mxu0 0.0
    %347 = vmatprep.subr.mxu0 0.0
    %348 = vmatpush1.msra.mxu0 0.0
    %349 = vmatprep.subr.mxu0 0.0
    %350 = vmatpush1.msra.mxu0 0.0
    %351 = vmatprep.subr.mxu0 0.0
    %352 = vmatpush1.msra.mxu0 0.0
    %353 = vmatprep.subr.mxu0 0.0
    %354 = vmatpush1.msra.mxu0 0.0
    %355 = vmatprep.subr.mxu0 0.0
    %356 = vmatpush1.msra.mxu0 0.0
    %357 = vmatprep.subr.mxu0 0.0
    %358 = vmatpush1.msra.mxu0 0.0
    %359 = vmatprep.subr.mxu0 0.0
    %360 = vmatpush1.msra.mxu0 0.0
    %361 = vmatprep.subr.mxu0 0.0
    %362 = vmatpush1.msra.mxu0 0.0
    %363 = vmatprep.subr.mxu0 0.0
    %364 = vmatpush1.msra.mxu0 0.0
    %365 = vmatprep.subr.mxu0 0.0
    %366 = vmatpush1.msra.mxu0 0.0
    %367 = vmatprep.mubr.f32.mxu0 0.0
    %368 = vmatmul.mubr.f32.gmra.mrb[0].mxu0 %v301
    %v369 = vpop.f32.mrb[0].mxu0
    %v370 = vadd.f32 %v151, %v369
    %v371 = vpop.f32.mrb[0].mxu0
    %372 = vdwg.mxu0
    %v373 = vtanh.pop %v370
    %v374 = vstv %s302
    %v375 = vmul.f32 %v374, %v373
    %v376 = vadd.f32 %v301, %v375
    %s377 = sld [smem:[#allocation2 + $0x3]]
    %378 = vmatprep.subr.mxu0 0.0
    %379 = vmatpush1.msra.mxu0 %v128
    %380 = vmatprep.subr.mxu0 0.0
    %381 = vmatpush1.msra.mxu0 %v129
    %382 = vmatprep.subr.mxu0 0.0
    %383 = vmatpush1.msra.mxu0 %v130
    %384 = vmatprep.subr.mxu0 0.0
    %385 = vmatpush1.msra.mxu0 %v131
    %386 = vmatprep.subr.mxu0 0.0
    %387 = vmatpush1.msra.mxu0 %v132
    %388 = vmatprep.subr.mxu0 0.0
    %389 = vmatpush1.msra.mxu0 %v133
    %390 = vmatprep.subr.mxu0 0.0
    %391 = vmatpush1.msra.mxu0 %v134
    %392 = vmatprep.subr.mxu0 0.0
    %393 = vmatpush1.msra.mxu0 %v135
    %394 = vmatprep.subr.mxu0 0.0
    %395 = vmatpush1.msra.mxu0 %v136
    %396 = vmatprep.subr.mxu0 0.0
    %397 = vmatpush1.msra.mxu0 %v137
    %398 = vmatprep.subr.mxu0 0.0
    %399 = vmatpush1.msra.mxu0 %v138
    %400 = vmatprep.subr.mxu0 0.0
    %401 = vmatpush1.msra.mxu0 %v139
    %402 = vmatprep.subr.mxu0 0.0
    %403 = vmatpush1.msra.mxu0 %v140
    %404 = vmatprep.subr.mxu0 0.0
    %405 = vmatpush1.msra.mxu0 %v141
    %406 = vmatprep.subr.mxu0 0.0
    %407 = vmatpush1.msra.mxu0 %v142
    %408 = vmatprep.subr.mxu0 0.0
    %409 = vmatpush1.msra.mxu0 %v143
    %410 = vmatprep.subr.mxu0 0.0
    %411 = vmatpush1.msra.mxu0 0.0
    %412 = vmatprep.subr.mxu0 0.0
    %413 = vmatpush1.msra.mxu0 0.0
    %414 = vmatprep.subr.mxu0 0.0
    %415 = vmatpush1.msra.mxu0 0.0
    %416 = vmatprep.subr.mxu0 0.0
    %417 = vmatpush1.msra.mxu0 0.0
    %418 = vmatprep.subr.mxu0 0.0
    %419 = vmatpush1.msra.mxu0 0.0
    %420 = vmatprep.subr.mxu0 0.0
    %421 = vmatpush1.msra.mxu0 0.0
    %422 = vmatprep.subr.mxu0 0.0
    %423 = vmatpush1.msra.mxu0 0.0
    %424 = vmatprep.subr.mxu0 0.0
    %425 = vmatpush1.msra.mxu0 0.0
    %426 = vmatprep.subr.mxu0 0.0
    %427 = vmatpush1.msra.mxu0 0.0
    %428 = vmatprep.subr.mxu0 0.0
    %429 = vmatpush1.msra.mxu0 0.0
    %430 = vmatprep.subr.mxu0 0.0
    %431 = vmatpush1.msra.mxu0 0.0
    %432 = vmatprep.subr.mxu0 0.0
    %433 = vmatpush1.msra.mxu0 0.0
    %434 = vmatprep.subr.mxu0 0.0
    %435 = vmatpush1.msra.mxu0 0.0
    %436 = vmatprep.subr.mxu0 0.0
    %437 = vmatpush1.msra.mxu0 0.0
    %438 = vmatprep.subr.mxu0 0.0
    %439 = vmatpush1.msra.mxu0 0.0
    %440 = vmatprep.subr.mxu0 0.0
    %441 = vmatpush1.msra.mxu0 0.0
    %442 = vmatprep.mubr.f32.mxu0 0.0
    %443 = vmatmul.mubr.f32.gmra.mrb[0].mxu0 %v376
    %v444 = vpop.f32.mrb[0].mxu0
    %v445 = vadd.f32 %v151, %v444
    %v446 = vpop.f32.mrb[0].mxu0
    %447 = vdwg.mxu0
    %v448 = vtanh.pop %v445
    %v449 = vstv %s377
    %v450 = vmul.f32 %v449, %v448
    %v451 = vadd.f32 %v376, %v450
    %s452 = sld [smem:[#allocation2 + $0x4]]
    %453 = vmatprep.subr.mxu0 0.0
    %454 = vmatpush1.msra.mxu0 %v128
    %455 = vmatprep.subr.mxu0 0.0
    %456 = vmatpush1.msra.mxu0 %v129
    %457 = vmatprep.subr.mxu0 0.0
    %458 = vmatpush1.msra.mxu0 %v130
    %459 = vmatprep.subr.mxu0 0.0
    %460 = vmatpush1.msra.mxu0 %v131
    %461 = vmatprep.subr.mxu0 0.0
    %462 = vmatpush1.msra.mxu0 %v132
    %463 = vmatprep.subr.mxu0 0.0
    %464 = vmatpush1.msra.mxu0 %v133
    %465 = vmatprep.subr.mxu0 0.0
    %466 = vmatpush1.msra.mxu0 %v134
    %467 = vmatprep.subr.mxu0 0.0
    %468 = vmatpush1.msra.mxu0 %v135
    %469 = vmatprep.subr.mxu0 0.0
    %470 = vmatpush1.msra.mxu0 %v136
    %471 = vmatprep.subr.mxu0 0.0
    %472 = vmatpush1.msra.mxu0 %v137
    %473 = vmatprep.subr.mxu0 0.0
    %474 = vmatpush1.msra.mxu0 %v138
    %475 = vmatprep.subr.mxu0 0.0
    %476 = vmatpush1.msra.mxu0 %v139
    %477 = vmatprep.subr.mxu0 0.0
    %478 = vmatpush1.msra.mxu0 %v140
    %479 = vmatprep.subr.mxu0 0.0
    %480 = vmatpush1.msra.mxu0 %v141
    %481 = vmatprep.subr.mxu0 0.0
    %482 = vmatpush1.msra.mxu0 %v142
    %483 = vmatprep.subr.mxu0 0.0
    %484 = vmatpush1.msra.mxu0 %v143
    %485 = vmatprep.subr.mxu0 0.0
    %486 = vmatpush1.msra.mxu0 0.0
    %487 = vmatprep.subr.mxu0 0.0
    %488 = vmatpush1.msra.mxu0 0.0
    %489 = vmatprep.subr.mxu0 0.0
    %490 = vmatpush1.msra.mxu0 0.0
    %491 = vmatprep.subr.mxu0 0.0
    %492 = vmatpush1.msra.mxu0 0.0
    %493 = vmatprep.subr.mxu0 0.0
    %494 = vmatpush1.msra.mxu0 0.0
    %495 = vmatprep.subr.mxu0 0.0
    %496 = vmatpush1.msra.mxu0 0.0
    %497 = vmatprep.subr.mxu0 0.0
    %498 = vmatpush1.msra.mxu0 0.0
    %499 = vmatprep.subr.mxu0 0.0
    %500 = vmatpush1.msra.mxu0 0.0
    %501 = vmatprep.subr.mxu0 0.0
    %502 = vmatpush1.msra.mxu0 0.0
    %503 = vmatprep.subr.mxu0 0.0
    %504 = vmatpush1.msra.mxu0 0.0
    %505 = vmatprep.subr.mxu0 0.0
    %506 = vmatpush1.msra.mxu0 0.0
    %507 = vmatprep.subr.mxu0 0.0
    %508 = vmatpush1.msra.mxu0 0.0
    %509 = vmatprep.subr.mxu0 0.0
    %510 = vmatpush1.msra.mxu0 0.0
    %511 = vmatprep.subr.mxu0 0.0
    %512 = vmatpush1.msra.mxu0 0.0
    %513 = vmatprep.subr.mxu0 0.0
    %514 = vmatpush1.msra.mxu0 0.0
    %515 = vmatprep.subr.mxu0 0.0
    %516 = vmatpush1.msra.mxu0 0.0
    %517 = vmatprep.mubr.f32.mxu0 0.0
    %518 = vmatmul.mubr.f32.gmra.mrb[0].mxu0 %v451
    %v519 = vpop.f32.mrb[0].mxu0
    %v520 = vadd.f32 %v151, %v519
    %v521 = vpop.f32.mrb[0].mxu0
    %522 = vdwg.mxu0
    %v523 = vtanh.pop %v520
    %v524 = vstv %s452
    %v525 = vmul.f32 %v524, %v523
    %v526 = vadd.f32 %v451, %v525
    %s527 = sld [smem:[#allocation2 + $0x5]]
    %528 = vmatprep.subr.mxu0 0.0
    %529 = vmatpush1.msra.mxu0 %v128
    %530 = vmatprep.subr.mxu0 0.0
    %531 = vmatpush1.msra.mxu0 %v129
    %532 = vmatprep.subr.mxu0 0.0
    %533 = vmatpush1.msra.mxu0 %v130
    %534 = vmatprep.subr.mxu0 0.0
    %535 = vmatpush1.msra.mxu0 %v131
    %536 = vmatprep.subr.mxu0 0.0
    %537 = vmatpush1.msra.mxu0 %v132
    %538 = vmatprep.subr.mxu0 0.0
    %539 = vmatpush1.msra.mxu0 %v133
    %540 = vmatprep.subr.mxu0 0.0
    %541 = vmatpush1.msra.mxu0 %v134
    %542 = vmatprep.subr.mxu0 0.0
    %543 = vmatpush1.msra.mxu0 %v135
    %544 = vmatprep.subr.mxu0 0.0
    %545 = vmatpush1.msra.mxu0 %v136
    %546 = vmatprep.subr.mxu0 0.0
    %547 = vmatpush1.msra.mxu0 %v137
    %548 = vmatprep.subr.mxu0 0.0
    %549 = vmatpush1.msra.mxu0 %v138
    %550 = vmatprep.subr.mxu0 0.0
    %551 = vmatpush1.msra.mxu0 %v139
    %552 = vmatprep.subr.mxu0 0.0
    %553 = vmatpush1.msra.mxu0 %v140
    %554 = vmatprep.subr.mxu0 0.0
    %555 = vmatpush1.msra.mxu0 %v141
    %556 = vmatprep.subr.mxu0 0.0
    %557 = vmatpush1.msra.mxu0 %v142
    %558 = vmatprep.subr.mxu0 0.0
    %559 = vmatpush1.msra.mxu0 %v143
    %560 = vmatprep.subr.mxu0 0.0
    %561 = vmatpush1.msra.mxu0 0.0
    %562 = vmatprep.subr.mxu0 0.0
    %563 = vmatpush1.msra.mxu0 0.0
    %564 = vmatprep.subr.mxu0 0.0
    %565 = vmatpush1.msra.mxu0 0.0
    %566 = vmatprep.subr.mxu0 0.0
    %567 = vmatpush1.msra.mxu0 0.0
    %568 = vmatprep.subr.mxu0 0.0
    %569 = vmatpush1.msra.mxu0 0.0
    %570 = vmatprep.subr.mxu0 0.0
    %571 = vmatpush1.msra.mxu0 0.0
    %572 = vmatprep.subr.mxu0 0.0
    %573 = vmatpush1.msra.mxu0 0.0
    %574 = vmatprep.subr.mxu0 0.0
    %575 = vmatpush1.msra.mxu0 0.0
    %576 = vmatprep.subr.mxu0 0.0
    %577 = vmatpush1.msra.mxu0 0.0
    %578 = vmatprep.subr.mxu0 0.0
    %579 = vmatpush1.msra.mxu0 0.0
    %580 = vmatprep.subr.mxu0 0.0
    %581 = vmatpush1.msra.mxu0 0.0
    %582 = vmatprep.subr.mxu0 0.0
    %583 = vmatpush1.msra.mxu0 0.0
    %584 = vmatprep.subr.mxu0 0.0
    %585 = vmatpush1.msra.mxu0 0.0
    %586 = vmatprep.subr.mxu0 0.0
    %587 = vmatpush1.msra.mxu0 0.0
    %588 = vmatprep.subr.mxu0 0.0
    %589 = vmatpush1.msra.mxu0 0.0
    %590 = vmatprep.subr.mxu0 0.0
    %591 = vmatpush1.msra.mxu0 0.0
    %592 = vmatprep.mubr.f32.mxu0 0.0
    %593 = vmatmul.mubr.f32.gmra.mrb[0].mxu0 %v526
    %v594 = vpop.f32.mrb[0].mxu0
    %v595 = vadd.f32 %v151, %v594
    %v596 = vpop.f32.mrb[0].mxu0
    %597 = vdwg.mxu0
    %v598 = vtanh.pop %v595
    %v599 = vstv %s527
    %v600 = vmul.f32 %v599, %v598
    %v601 = vadd.f32 %v526, %v600
    %s602 = sld [smem:[#allocation2 + $0x6]]
    %603 = vmatprep.subr.mxu0 0.0
    %604 = vmatpush1.msra.mxu0 %v128
    %605 = vmatprep.subr.mxu0 0.0
    %606 = vmatpush1.msra.mxu0 %v129
    %607 = vmatprep.subr.mxu0 0.0
    %608 = vmatpush1.msra.mxu0 %v130
    %609 = vmatprep.subr.mxu0 0.0
    %610 = vmatpush1.msra.mxu0 %v131
    %611 = vmatprep.subr.mxu0 0.0
    %612 = vmatpush1.msra.mxu0 %v132
    %613 = vmatprep.subr.mxu0 0.0
    %614 = vmatpush1.msra.mxu0 %v133
    %615 = vmatprep.subr.mxu0 0.0
    %616 = vmatpush1.msra.mxu0 %v134
    %617 = vmatprep.subr.mxu0 0.0
    %618 = vmatpush1.msra.mxu0 %v135
    %619 = vmatprep.subr.mxu0 0.0
    %620 = vmatpush1.msra.mxu0 %v136
    %621 = vmatprep.subr.mxu0 0.0
    %622 = vmatpush1.msra.mxu0 %v137
    %623 = vmatprep.subr.mxu0 0.0
    %624 = vmatpush1.msra.mxu0 %v138
    %625 = vmatprep.subr.mxu0 0.0
    %626 = vmatpush1.msra.mxu0 %v139
    %627 = vmatprep.subr.mxu0 0.0
    %628 = vmatpush1.msra.mxu0 %v140
    %629 = vmatprep.subr.mxu0 0.0
    %630 = vmatpush1.msra.mxu0 %v141
    %631 = vmatprep.subr.mxu0 0.0
    %632 = vmatpush1.msra.mxu0 %v142
    %633 = vmatprep.subr.mxu0 0.0
    %634 = vmatpush1.msra.mxu0 %v143
    %635 = vmatprep.subr.mxu0 0.0
    %636 = vmatpush1.msra.mxu0 0.0
    %637 = vmatprep.subr.mxu0 0.0
    %638 = vmatpush1.msra.mxu0 0.0
    %639 = vmatprep.subr.mxu0 0.0
    %640 = vmatpush1.msra.mxu0 0.0
    %641 = vmatprep.subr.mxu0 0.0
    %642 = vmatpush1.msra.mxu0 0.0
    %643 = vmatprep.subr.mxu0 0.0
    %644 = vmatpush1.msra.mxu0 0.0
    %645 = vmatprep.subr.mxu0 0.0
    %646 = vmatpush1.msra.mxu0 0.0
    %647 = vmatprep.subr.mxu0 0.0
    %648 = vmatpush1.msra.mxu0 0.0
    %649 = vmatprep.subr.mxu0 0.0
    %650 = vmatpush1.msra.mxu0 0.0
    %651 = vmatprep.subr.mxu0 0.0
    %652 = vmatpush1.msra.mxu0 0.0
    %653 = vmatprep.subr.mxu0 0.0
    %654 = vmatpush1.msra.mxu0 0.0
    %655 = vmatprep.subr.mxu0 0.0
    %656 = vmatpush1.msra.mxu0 0.0
    %657 = vmatprep.subr.mxu0 0.0
    %658 = vmatpush1.msra.mxu0 0.0
    %659 = vmatprep.subr.mxu0 0.0
    %660 = vmatpush1.msra.mxu0 0.0
    %661 = vmatprep.subr.mxu0 0.0
    %662 = vmatpush1.msra.mxu0 0.0
    %663 = vmatprep.subr.mxu0 0.0
    %664 = vmatpush1.msra.mxu0 0.0
    %665 = vmatprep.subr.mxu0 0.0
    %666 = vmatpush1.msra.mxu0 0.0
    %667 = vmatprep.mubr.f32.mxu0 0.0
    %668 = vmatmul.mubr.f32.gmra.mrb[0].mxu0 %v601
    %v669 = vpop.f32.mrb[0].mxu0
    %v670 = vadd.f32 %v151, %v669
    %v671 = vpop.f32.mrb[0].mxu0
    %672 = vdwg.mxu0
    %v673 = vtanh.pop %v670
    %v674 = vstv %s602
    %v675 = vmul.f32 %v674, %v673
    %v676 = vadd.f32 %v601, %v675
    %v677 = vld [vmem:[#allocation6] sm:$0xff]
    %v678 = vld [vmem:[#allocation10] sm:$0xff]
    %v679 = vld [vmem:[#allocation10 + $0x8] sm:$0xff]
    %v680 = vld [vmem:[#allocation10 + $0x10] sm:$0xff]
    %v681 = vld [vmem:[#allocation10 + $0x18] sm:$0xff]
    %v682 = vld [vmem:[#allocation10 + $0x20] sm:$0xff]
    %v683 = vld [vmem:[#allocation10 + $0x28] sm:$0xff]
    %v684 = vld [vmem:[#allocation10 + $0x30] sm:$0xff]
    %v685 = vld [vmem:[#allocation10 + $0x38] sm:$0xff]
    %v686 = vld [vmem:[#allocation10 + $0x40] sm:$0xff]
    %v687 = vld [vmem:[#allocation10 + $0x48] sm:$0xff]
    %v688 = vld [vmem:[#allocation10 + $0x50] sm:$0xff]
    %v689 = vld [vmem:[#allocation10 + $0x58] sm:$0xff]
    %v690 = vld [vmem:[#allocation10 + $0x60] sm:$0xff]
    %v691 = vld [vmem:[#allocation10 + $0x68] sm:$0xff]
    %v692 = vld [vmem:[#allocation10 + $0x70] sm:$0xff]
    %v693 = vld [vmem:[#allocation10 + $0x78] sm:$0xff]
    %v694 = vld [vmem:[#allocation12] sm:$0xff]
    %v695 = vld [vmem:[#allocation12 + $0x8] sm:$0xff]
    %v696 = vld [vmem:[#allocation12 + $0x10] sm:$0xff]
    %v697 = vld [vmem:[#allocation12 + $0x18] sm:$0xff]
    %v698 = vld [vmem:[#allocation12 + $0x20] sm:$0xff]
    %v699 = vld [vmem:[#allocation12 + $0x28] sm:$0xff]
    %v700 = vld [vmem:[#allocation12 + $0x30] sm:$0xff]
    %v701 = vld [vmem:[#allocation12 + $0x38] sm:$0xff]
    %v702 = vld [vmem:[#allocation12 + $0x40] sm:$0xff]
    %v703 = vld [vmem:[#allocation12 + $0x48] sm:$0xff]
    %v704 = vld [vmem:[#allocation12 + $0x50] sm:$0xff]
    %v705 = vld [vmem:[#allocation12 + $0x58] sm:$0xff]
    %v706 = vld [vmem:[#allocation12 + $0x60] sm:$0xff]
    %v707 = vld [vmem:[#allocation12 + $0x68] sm:$0xff]
    %v708 = vld [vmem:[#allocation12 + $0x70] sm:$0xff]
    %v709 = vld [vmem:[#allocation12 + $0x78] sm:$0xff]
    %710 = vmatprep.subr.mxu0 0.0
    %711 = vmatpush1.msra.mxu0 %v694
    %712 = vmatprep.subr.mxu0 0.0
    %713 = vmatpush1.msra.mxu0 %v695
    %714 = vmatprep.subr.mxu0 0.0
    %715 = vmatpush1.msra.mxu0 %v696
    %716 = vmatprep.subr.mxu0 0.0
    %717 = vmatpush1.msra.mxu0 %v697
    %718 = vmatprep.subr.mxu0 0.0
    %719 = vmatpush1.msra.mxu0 %v698
    %720 = vmatprep.subr.mxu0 0.0
    %721 = vmatpush1.msra.mxu0 %v699
    %722 = vmatprep.subr.mxu0 0.0
    %723 = vmatpush1.msra.mxu0 %v700
    %724 = vmatprep.subr.mxu0 0.0
    %725 = vmatpush1.msra.mxu0 %v701
    %726 = vmatprep.subr.mxu0 0.0
    %727 = vmatpush1.msra.mxu0 %v702
    %728 = vmatprep.subr.mxu0 0.0
    %729 = vmatpush1.msra.mxu0 %v703
    %730 = vmatprep.subr.mxu0 0.0
    %731 = vmatpush1.msra.mxu0 %v704
    %732 = vmatprep.subr.mxu0 0.0
    %733 = vmatpush1.msra.mxu0 %v705
    %734 = vmatprep.subr.mxu0 0.0
    %735 = vmatpush1.msra.mxu0 %v706
    %736 = vmatprep.subr.mxu0 0.0
    %737 = vmatpush1.msra.mxu0 %v707
    %738 = vmatprep.subr.mxu0 0.0
    %739 = vmatpush1.msra.mxu0 %v708
    %740 = vmatprep.subr.mxu0 0.0
    %741 = vmatpush1.msra.mxu0 %v709
    %742 = vmatprep.subr.mxu0 0.0
    %743 = vmatpush1.msra.mxu0 0.0
    %744 = vmatprep.subr.mxu0 0.0
    %745 = vmatpush1.msra.mxu0 0.0
    %746 = vmatprep.subr.mxu0 0.0
    %747 = vmatpush1.msra.mxu0 0.0
    %748 = vmatprep.subr.mxu0 0.0
    %749 = vmatpush1.msra.mxu0 0.0
    %750 = vmatprep.subr.mxu0 0.0
    %751 = vmatpush1.msra.mxu0 0.0
    %752 = vmatprep.subr.mxu0 0.0
    %753 = vmatpush1.msra.mxu0 0.0
    %754 = vmatprep.subr.mxu0 0.0
    %755 = vmatpush1.msra.mxu0 0.0
    %756 = vmatprep.subr.mxu0 0.0
    %757 = vmatpush1.msra.mxu0 0.0
    %758 = vmatprep.subr.mxu0 0.0
    %759 = vmatpush1.msra.mxu0 0.0
    %760 = vmatprep.subr.mxu0 0.0
    %761 = vmatpush1.msra.mxu0 0.0
    %762 = vmatprep.subr.mxu0 0.0
    %763 = vmatpush1.msra.mxu0 0.0
    %764 = vmatprep.subr.mxu0 0.0
    %765 = vmatpush1.msra.mxu0 0.0
    %766 = vmatprep.subr.mxu0 0.0
    %767 = vmatpush1.msra.mxu0 0.0
    %768 = vmatprep.subr.mxu0 0.0
    %769 = vmatpush1.msra.mxu0 0.0
    %770 = vmatprep.subr.mxu0 0.0
    %771 = vmatpush1.msra.mxu0 0.0
    %772 = vmatprep.subr.mxu0 0.0
    %773 = vmatpush1.msra.mxu0 0.0
    %774 = vmatprep.mubr.f32.mxu0 0.0
    %775 = vmatmul.mubr.f32.gmra.mrb[0].mxu0 %v676
    %v776 = vpop.f32.mrb[0].mxu0
    %v777 = vadd.f32 0.0, %v776
    %v778 = vpop.f32.mrb[0].mxu0
    %779 = vdwg.mxu0
    %780 = vmatprep.subr.mxu0 0.0
    %781 = vmatpush1.msra.mxu0 %v678
    %782 = vmatprep.subr.mxu0 0.0
    %783 = vmatpush1.msra.mxu0 %v679
    %784 = vmatprep.subr.mxu0 0.0
    %785 = vmatpush1.msra.mxu0 %v680
    %786 = vmatprep.subr.mxu0 0.0
    %787 = vmatpush1.msra.mxu0 %v681
    %788 = vmatprep.subr.mxu0 0.0
    %789 = vmatpush1.msra.mxu0 %v682
    %790 = vmatprep.subr.mxu0 0.0
    %791 = vmatpush1.msra.mxu0 %v683
    %792 = vmatprep.subr.mxu0 0.0
    %793 = vmatpush1.msra.mxu0 %v684
    %794 = vmatprep.subr.mxu0 0.0
    %795 = vmatpush1.msra.mxu0 %v685
    %796 = vmatprep.subr.mxu0 0.0
    %797 = vmatpush1.msra.mxu0 %v686
    %798 = vmatprep.subr.mxu0 0.0
    %799 = vmatpush1.msra.mxu0 %v687
    %800 = vmatprep.subr.mxu0 0.0
    %801 = vmatpush1.msra.mxu0 %v688
    %802 = vmatprep.subr.mxu0 0.0
    %803 = vmatpush1.msra.mxu0 %v689
    %804 = vmatprep.subr.mxu0 0.0
    %805 = vmatpush1.msra.mxu0 %v690
    %806 = vmatprep.subr.mxu0 0.0
    %807 = vmatpush1.msra.mxu0 %v691
    %808 = vmatprep.subr.mxu0 0.0
    %809 = vmatpush1.msra.mxu0 %v692
    %810 = vmatprep.subr.mxu0 0.0
    %811 = vmatpush1.msra.mxu0 %v693
    %812 = vmatprep.subr.mxu0 0.0
    %813 = vmatpush1.msra.mxu0 0.0
    %814 = vmatprep.subr.mxu0 0.0
    %815 = vmatpush1.msra.mxu0 0.0
    %816 = vmatprep.subr.mxu0 0.0
    %817 = vmatpush1.msra.mxu0 0.0
    %818 = vmatprep.subr.mxu0 0.0
    %819 = vmatpush1.msra.mxu0 0.0
    %820 = vmatprep.subr.mxu0 0.0
    %821 = vmatpush1.msra.mxu0 0.0
    %822 = vmatprep.subr.mxu0 0.0
    %823 = vmatpush1.msra.mxu0 0.0
    %824 = vmatprep.subr.mxu0 0.0
    %825 = vmatpush1.msra.mxu0 0.0
    %826 = vmatprep.subr.mxu0 0.0
    %827 = vmatpush1.msra.mxu0 0.0
    %828 = vmatprep.subr.mxu0 0.0
    %829 = vmatpush1.msra.mxu0 0.0
    %830 = vmatprep.subr.mxu0 0.0
    %831 = vmatpush1.msra.mxu0 0.0
    %832 = vmatprep.subr.mxu0 0.0
    %833 = vmatpush1.msra.mxu0 0.0
    %834 = vmatprep.subr.mxu0 0.0
    %835 = vmatpush1.msra.mxu0 0.0
    %836 = vmatprep.subr.mxu0 0.0
    %837 = vmatpush1.msra.mxu0 0.0
    %838 = vmatprep.subr.mxu0 0.0
    %839 = vmatpush1.msra.mxu0 0.0
    %840 = vmatprep.subr.mxu0 0.0
    %841 = vmatpush1.msra.mxu0 0.0
    %842 = vmatprep.subr.mxu0 0.0
    %843 = vmatpush1.msra.mxu0 0.0
    %844 = vmatprep.mubr.f32.mxu0 0.0
    %845 = vmatmul.mubr.f32.gmra.mrb[0].mxu0 %v677
    %v846 = vpop.f32.mrb[0].mxu0
    %v847 = vadd.f32 %v777, %v846
    %v848 = vpop.f32.mrb[0].mxu0
    %849 = vdwg.mxu0
    %v850 = vld [vmem:[%s7] sm:$0x1]
    %v852 = vlaneseq
    %v853 = vshrl.u32 %v852, 7
    %v854 = vsub.s32 0, %v853
    %v855 = vrot.slane %v850, %v854
    %v857 = vadd.f32 %v847, %v855
    %v858 = vxor.u32 %v857, 2147483648
    %v859 = vmul.f32 %v858, 1.442695
    %v860 = vpow.pop %v859
    %v861 = vadd.f32 %v860, 1.0
    %v862 = vrcp.pop %v861
    %v863 = vmul.f32 1.0, %v862
    %v864 = vtanh.pop %v857
    %v865 = vmul.f32 %v863, %v676
    %v866 = vsub.f32 1.0, %v863
    %v867 = vmul.f32 %v866, %v864
    %v868 = vadd.f32 %v865, %v867
    %v869 = vld [vmem:[#allocation13] sm:$0xff]
    %v870 = vld [vmem:[#allocation13 + $0x8] sm:$0xff]
    %v871 = vld [vmem:[#allocation13 + $0x10] sm:$0xff]
    %v872 = vld [vmem:[#allocation13 + $0x18] sm:$0xff]
    %v873 = vld [vmem:[#allocation13 + $0x20] sm:$0xff]
    %v874 = vld [vmem:[#allocation13 + $0x28] sm:$0xff]
    %v875 = vld [vmem:[#allocation13 + $0x30] sm:$0xff]
    %v876 = vld [vmem:[#allocation13 + $0x38] sm:$0xff]
    %v877 = vld [vmem:[#allocation13 + $0x40] sm:$0xff]
    %v878 = vld [vmem:[#allocation13 + $0x48] sm:$0xff]
    %v879 = vld [vmem:[#allocation13 + $0x50] sm:$0xff]
    %v880 = vld [vmem:[#allocation13 + $0x58] sm:$0xff]
    %v881 = vld [vmem:[#allocation13 + $0x60] sm:$0xff]
    %v882 = vld [vmem:[#allocation13 + $0x68] sm:$0xff]
    %v883 = vld [vmem:[#allocation13 + $0x70] sm:$0xff]
    %v884 = vld [vmem:[#allocation13 + $0x78] sm:$0xff]
    %v885 = vld [vmem:[%s9] sm:$0x1]
    %v887 = vlaneseq
    %v888 = vshrl.u32 %v887, 7
    %v889 = vsub.s32 0, %v888
    %v890 = vrot.slane %v885, %v889
    %892 = vmatprep.subr.mxu0 0.0
    %893 = vmatpush1.msra.mxu0 %v869
    %894 = vmatprep.subr.mxu0 0.0
    %895 = vmatpush1.msra.mxu0 %v870
    %896 = vmatprep.subr.mxu0 0.0
    %897 = vmatpush1.msra.mxu0 %v871
    %898 = vmatprep.subr.mxu0 0.0
    %899 = vmatpush1.msra.mxu0 %v872
    %900 = vmatprep.subr.mxu0 0.0
    %901 = vmatpush1.msra.mxu0 %v873
    %902 = vmatprep.subr.mxu0 0.0
    %903 = vmatpush1.msra.mxu0 %v874
    %904 = vmatprep.subr.mxu0 0.0
    %905 = vmatpush1.msra.mxu0 %v875
    %906 = vmatprep.subr.mxu0 0.0
    %907 = vmatpush1.msra.mxu0 %v876
    %908 = vmatprep.subr.mxu0 0.0
    %909 = vmatpush1.msra.mxu0 %v877
    %910 = vmatprep.subr.mxu0 0.0
    %911 = vmatpush1.msra.mxu0 %v878
    %912 = vmatprep.subr.mxu0 0.0
    %913 = vmatpush1.msra.mxu0 %v879
    %914 = vmatprep.subr.mxu0 0.0
    %915 = vmatpush1.msra.mxu0 %v880
    %916 = vmatprep.subr.mxu0 0.0
    %917 = vmatpush1.msra.mxu0 %v881
    %918 = vmatprep.subr.mxu0 0.0
    %919 = vmatpush1.msra.mxu0 %v882
    %920 = vmatprep.subr.mxu0 0.0
    %921 = vmatpush1.msra.mxu0 %v883
    %922 = vmatprep.subr.mxu0 0.0
    %923 = vmatpush1.msra.mxu0 %v884
    %924 = vmatprep.subr.mxu0 0.0
    %925 = vmatpush1.msra.mxu0 0.0
    %926 = vmatprep.subr.mxu0 0.0
    %927 = vmatpush1.msra.mxu0 0.0
    %928 = vmatprep.subr.mxu0 0.0
    %929 = vmatpush1.msra.mxu0 0.0
    %930 = vmatprep.subr.mxu0 0.0
    %931 = vmatpush1.msra.mxu0 0.0
    %932 = vmatprep.subr.mxu0 0.0
    %933 = vmatpush1.msra.mxu0 0.0
    %934 = vmatprep.subr.mxu0 0.0
    %935 = vmatpush1.msra.mxu0 0.0
    %936 = vmatprep.subr.mxu0 0.0
    %937 = vmatpush1.msra.mxu0 0.0
    %938 = vmatprep.subr.mxu0 0.0
    %939 = vmatpush1.msra.mxu0 0.0
    %940 = vmatprep.subr.mxu0 0.0
    %941 = vmatpush1.msra.mxu0 0.0
    %942 = vmatprep.subr.mxu0 0.0
    %943 = vmatpush1.msra.mxu0 0.0
    %944 = vmatprep.subr.mxu0 0.0
    %945 = vmatpush1.msra.mxu0 0.0
    %946 = vmatprep.subr.mxu0 0.0
    %947 = vmatpush1.msra.mxu0 0.0
    %948 = vmatprep.subr.mxu0 0.0
    %949 = vmatpush1.msra.mxu0 0.0
    %950 = vmatprep.subr.mxu0 0.0
    %951 = vmatpush1.msra.mxu0 0.0
    %952 = vmatprep.subr.mxu0 0.0
    %953 = vmatpush1.msra.mxu0 0.0
    %954 = vmatprep.subr.mxu0 0.0
    %955 = vmatpush1.msra.mxu0 0.0
    %956 = vmatprep.mubr.f32.mxu0 0.0
    %957 = vmatmul.mubr.f32.gmra.mrb[0].mxu0 %v868
    %v958 = vpop.f32.mrb[0].mxu0
    %v959 = vadd.f32 %v890, %v958
    %v960 = vpop.f32.mrb[0].mxu0
    %961 = vdwg.mxu0
    %962 = vst [vmem:[#allocation15] sm:$0xff] %v959
    %963 = vst [vmem:[#allocation16] sm:$0xff] %v868
    // Predicated region
    $region70: #{tpu_custom_call.1} parent=1 // pred_check
      _
    $region71: #{tpu_custom_call.1} parent=1 // pred_check_branch
      %965 = sbr.rel (0) target = $region73
    $region72: #{tpu_custom_call.1} parent=1 // pred_region
      %s967 = ssub.s32 128, 128
      %968 = vsyncadd [#allocation4], %s967
      %s970 = sshll.u32 [#allocation15], 4
      %s971 = int_to_ptr.vmem [resolvable:$true] %s970
      %973 = dma.vmem_to_hbm [thread:$0]  %s971, 128, %s10, [#allocation4]
    $region73: #{tpu_custom_call.1} parent=1 // pred_fallthru
      _
    // Predicated region
    $region74: #{tpu_custom_call.1} parent=1 // pred_check
      _
    $region75: #{tpu_custom_call.1} parent=1 // pred_check_branch
      %975 = sbr.rel (0) target = $region77
    $region76: #{tpu_custom_call.1} parent=1 // pred_region
      %s977 = ssub.s32 128, 128
      %978 = vsyncadd [#allocation17], %s977
      %s980 = sshll.u32 [#allocation16], 4
      %s981 = int_to_ptr.vmem [resolvable:$true] %s980
      %983 = dma.vmem_to_hbm [thread:$0]  %s981, 128, %s11, [#allocation17]
    $region77: #{tpu_custom_call.1} parent=1 // pred_fallthru
      _
    // Predicated region
    $region78: #{tpu_custom_call.1} parent=1 // pred_check
      _
    $region79: #{tpu_custom_call.1} parent=1 // pred_check_branch
      %985 = sbr.rel (0) target = $region81
    $region80: #{tpu_custom_call.1} parent=1 // pred_region
      %986 = dma.done [#allocation4], 128
    $region81: #{tpu_custom_call.1} parent=1 // pred_fallthru
      _
    // Predicated region
    $region82: #{tpu_custom_call.1} parent=1 // pred_check
      _
    $region83: #{tpu_custom_call.1} parent=1 // pred_check_branch
      %988 = sbr.rel (0) target = $region85
    $region84: #{tpu_custom_call.1} parent=1 // pred_region
      %989 = dma.done [#allocation17], 128
    $region85: #{tpu_custom_call.1} parent=1 // pred_fallthru
      _
    %990 = vsyncpa [#allocation3], 1
    %991 = vsyncpa [#allocation8], 1
    %992 = vsyncpa [#allocation11], 1
    %993 = vsyncpa [#allocation14], 1
    %994 = vsyncpa [#allocation4], 1
    %995 = vsyncpa [#allocation17], 1
    %996 = vsyncpa [#allocation5], 1

</llo_original>
